<compile_context>
chip_gen: v7x
topology: tpu7x:2x2x1
jax: 0.10.0
libtpu: 0.0.40
codegen_flags: <defaults>
</compile_context>

<pallas_src>
import jax
import jax.numpy as jnp
from jax.experimental import pallas as pl
from jax.experimental.pallas import tpu as pltpu


def _lgc_kernel_acc(adj_ref, src_ref, ci_ref, out_ref, acc_ref):
    """Multi-k-tile path: accumulate adjacency @ weighted_src in f32, then
    scale by ci and write out at the last reduction step."""
    k = pl.program_id(1)

    @pl.when(k == 0)
    def _():
        acc_ref[...] = jnp.zeros_like(acc_ref)

    # int8 (0/1) adjacency -> f32 -> bf16 for the MXU; cheap VPU work hidden
    # under the adjacency DMA.
    adj = adj_ref[...].astype(jnp.float32).astype(src_ref.dtype)
    acc_ref[...] += jnp.dot(adj, src_ref[...],
                            preferred_element_type=jnp.float32)

    @pl.when(k == pl.num_programs(1) - 1)
    def _():
        out_ref[...] = (acc_ref[...] * ci_ref[...]).astype(out_ref.dtype)


def _lgc_kernel_single(adj_ref, src_ref, ci_ref, out_ref):
    """gk == 1 fast path: no accumulator scratch needed."""
    adj = adj_ref[...].astype(jnp.float32).astype(src_ref.dtype)
    acc = jnp.dot(adj, src_ref[...], preferred_element_type=jnp.float32)
    out_ref[...] = (acc * ci_ref[...]).astype(out_ref.dtype)


def _round_up(x, m):
    return ((x + m - 1) // m) * m


def _num_tensorcores():
    """Best-effort TensorCore-per-chip count (v7x = 2, v5e/v6e = 1)."""
    try:
        info = pltpu.get_tpu_info()
        for attr in ("num_cores", "tensorcores_per_chip", "num_tensorcores",
                     "cores_per_chip"):
            n = getattr(info, attr, None)
            if n:
                return int(n)
    except Exception:
        pass
    return 1


def light_graph_conv(adj, src_feats, cj, ci, *, tm=512, tk=512,
                     compute_dtype=jnp.bfloat16):
    """out = (adj @ (src_feats * cj)) * ci, computed in a Pallas TPU kernel."""
    n_dst, n_src = adj.shape
    n_src2, d = src_feats.shape
    assert n_src2 == n_src
    out_dtype = src_feats.dtype

    # --- tile sizes -------------------------------------------------------
    # Only force >=2 dst tiles when there are 2 TensorCores to shard across
    # (v7x); on single-TC chips extra grid steps just add overhead.
    if _num_tensorcores() >= 2 and n_dst >= 256:
        tm = min(tm, _round_up((n_dst + 1) // 2, 128))
    tm = max(128, min(tm, _round_up(n_dst, 128)))
    tk = max(128, min(tk, _round_up(n_src, 128)))

    mp = _round_up(n_dst, tm)
    kp = _round_up(n_src, tk)
    gm, gk = mp // tm, kp // tk

    # --- single fused prep pass: pad + cast + fold cj into src -------------
    # Zero-padded rows/cols contribute nothing; padded dst rows are sliced off
    # at the end.
    adj_p = jnp.pad(adj, ((0, mp - n_dst), (0, kp - n_src))).astype(jnp.int8)
    src_w = src_feats.astype(jnp.float32) * cj.astype(jnp.float32)
    src_p = jnp.pad(src_w, ((0, kp - n_src), (0, 0))).astype(compute_dtype)
    ci_p = jnp.pad(ci, ((0, mp - n_dst), (0, 0))).astype(jnp.float32)

    # --- VMEM budget (double-buffered inputs/outputs + f32 accumulator) ----
    lane = 128
    csz = jnp.dtype(compute_dtype).itemsize
    osz = jnp.dtype(out_dtype).itemsize
    d_pad = _round_up(d, lane)
    vmem_bytes = (2 * tm * tk * 1                        # int8 adjacency tiles
                  + 2 * tk * d_pad * csz                 # weighted src tiles
                  + 2 * tm * lane * 4                    # ci (tm,1) -> (tm,128)
                  + 2 * tm * d_pad * osz                 # output tiles
                  + (tm * d_pad * 4 if gk > 1 else 0))   # f32 accumulator
    vmem_limit = int(min(48 * 1024 * 1024,
                         max(32 * 1024 * 1024, 2 * vmem_bytes)))

    if gk == 1:
        grid_spec = pltpu.PrefetchScalarGridSpec(
            num_scalar_prefetch=0,
            grid=(gm,),
            in_specs=[
                pl.BlockSpec((tm, tk), lambda i: (i, 0)),   # adjacency (int8)
                pl.BlockSpec((tk, d), lambda i: (0, 0)),    # weighted src
                pl.BlockSpec((tm, 1), lambda i: (i, 0)),    # ci
            ],
            out_specs=pl.BlockSpec((tm, d), lambda i: (i, 0)),
        )
        kernel = _lgc_kernel_single
        dim_sem = ("parallel",)
    else:
        grid_spec = pltpu.PrefetchScalarGridSpec(
            num_scalar_prefetch=0,
            grid=(gm, gk),
            in_specs=[
                pl.BlockSpec((tm, tk), lambda i, k: (i, k)),   # adjacency
                pl.BlockSpec((tk, d), lambda i, k: (k, 0)),    # weighted src
                pl.BlockSpec((tm, 1), lambda i, k: (i, 0)),    # ci
            ],
            out_specs=pl.BlockSpec((tm, d), lambda i, k: (i, 0)),
            scratch_shapes=[pltpu.VMEM((tm, d), jnp.float32)],
        )
        kernel = _lgc_kernel_acc
        dim_sem = ("parallel", "arbitrary")

    out = pl.pallas_call(
        kernel,
        out_shape=jax.ShapeDtypeStruct((mp, d), out_dtype),
        grid_spec=grid_spec,
        compiler_params=pltpu.CompilerParams(
            dimension_semantics=dim_sem,
            vmem_limit_bytes=vmem_limit),
    )(adj_p, src_p, ci_p)

    return out[:n_dst]


if __name__ == "__main__":
    key = jax.random.PRNGKey(0)
    k_adj, k_feat = jax.random.split(key)

    # Small, deliberately ragged shapes to exercise padding and both paths.
    n_src, n_dst, d = 384, 192, 128

    # Deterministic synthetic bipartite graph: ~5% edge density, 0/1 adjacency.
    adj = (jax.random.uniform(k_adj, (n_dst, n_src)) < 0.05).astype(jnp.float32)
    src_feats = jax.random.normal(k_feat, (n_src, d), dtype=jnp.float32)

    # ci / cj are degree^(-1/2) normalizers (shape (*, 1)); derive from adjacency.
    out_deg = jnp.maximum(adj.sum(axis=0), 1.0)                 # (n_src,)
    in_deg = jnp.maximum(adj.sum(axis=1), 1.0)                  # (n_dst,)
    cj = (out_deg ** -0.5).reshape(n_src, 1).astype(jnp.float32)
    ci = (in_deg ** -0.5).reshape(n_dst, 1).astype(jnp.float32)

    # Pure-JAX f32 reference.
    ref = (adj @ (src_feats * cj)) * ci

    # Default tiles -> gk == 1 fast path (no accumulator scratch).
    out_a = jax.block_until_ready(light_graph_conv(adj, src_feats, cj, ci))
    # Small tiles -> multi-k accumulator path.
    out_b = jax.block_until_ready(
        light_graph_conv(adj, src_feats, cj, ci, tm=128, tk=128))

    for out in (out_a, out_b):
        assert out.shape == (n_dst, d)
        max_err = float(jnp.max(jnp.abs(out - ref)))
        assert jnp.allclose(out, ref, atol=2e-2, rtol=2e-2), \
            f"mismatch vs reference (max abs err {max_err})"

    print("KERNEL_OK")
</pallas_src>

<mosaic_0001>
module attributes {stable_mosaic.version = 11 : i64} {
  func.func @_lgc_kernel_single(%arg0: i32, %arg1: memref<256x384xi8, #tpu.memory_space<vmem>>, %arg2: memref<384x128xbf16, #tpu.memory_space<vmem>>, %arg3: memref<256x1xf32, #tpu.memory_space<vmem>>, %arg4: memref<256x128xf32, #tpu.memory_space<vmem>>) attributes {dimension_semantics = [#tpu.dimension_semantics<parallel>], iteration_bounds = array<i64: 1>, scalar_prefetch = 0 : i64, scratch_operands = 0 : i64, tpu.core_type = #tpu.core_type<tc>, window_params = [{transform_indices = @transform_0, window_bounds = array<i64: 256, 384>}, {pipeline_mode = #tpu.pipeline_mode<synchronous>, transform_indices = @transform_1, window_bounds = array<i64: 384, 128>}, {transform_indices = @transform_2, window_bounds = array<i64: 256, 1>}, {transform_indices = @transform_3, window_bounds = array<i64: 256, 128>}]} {
    %c0 = arith.constant 0 : index
    %c0_0 = arith.constant 0 : index
    %0 = vector.load %arg1[%c0, %c0_0] : memref<256x384xi8, #tpu.memory_space<vmem>>, vector<256x384xi8>
    %1 = arith.sitofp %0 : vector<256x384xi8> to vector<256x384xf32>
    %2 = arith.truncf %1 : vector<256x384xf32> to vector<256x384xbf16>
    %c0_1 = arith.constant 0 : index
    %c0_2 = arith.constant 0 : index
    %3 = vector.load %arg2[%c0_1, %c0_2] : memref<384x128xbf16, #tpu.memory_space<vmem>>, vector<384x128xbf16>
    %cst = arith.constant dense<0.000000e+00> : vector<256x128xf32>
    %4 = tpu.matmul %2, %3, %cst {dimension_numbers = #tpu.dot_dimension_numbers<[1], [0], [0], [1], [0, 0, 1, 1], [], []>} : vector<256x384xbf16>, vector<384x128xbf16>, vector<256x128xf32> -> vector<256x128xf32>
    %c0_3 = arith.constant 0 : index
    %c0_4 = arith.constant 0 : index
    %5 = vector.load %arg3[%c0_3, %c0_4] : memref<256x1xf32, #tpu.memory_space<vmem>>, vector<256x1xf32>
    %6 = vector.broadcast %5 : vector<256x1xf32> to vector<256x128xf32>
    %7 = arith.mulf %4, %6 : vector<256x128xf32>
    %c0_5 = arith.constant 0 : index
    %c0_6 = arith.constant 0 : index
    %8 = vector.load %arg4[%c0_5, %c0_6] : memref<256x128xf32, #tpu.memory_space<vmem>>, vector<256x128xf32>
    tpu.vector_store %arg4[%c0_5, %c0_6], %7 {strides = array<i32>} : memref<256x128xf32, #tpu.memory_space<vmem>>, vector<256x128xf32>,
    return
  }
  func.func @transform_0(%arg0: i32) -> (i32, i32) {
    %c0_i32 = arith.constant 0 : i32
    %c0_i32_0 = arith.constant 0 : i32
    return %arg0, %c0_i32 : i32, i32
  }
  func.func @transform_1(%arg0: i32) -> (i32, i32) {
    %c0_i32 = arith.constant 0 : i32
    %c0_i32_0 = arith.constant 0 : i32
    %c0_i32_1 = arith.constant 0 : i32
    return %c0_i32, %c0_i32_0 : i32, i32
  }
  func.func @transform_2(%arg0: i32) -> (i32, i32) {
    %c0_i32 = arith.constant 0 : i32
    %c0_i32_0 = arith.constant 0 : i32
    return %arg0, %c0_i32 : i32, i32
  }
  func.func @transform_3(%arg0: i32) -> (i32, i32) {
    %c0_i32 = arith.constant 0 : i32
    %c0_i32_0 = arith.constant 0 : i32
    return %arg0, %c0_i32 : i32, i32
  }
}

</mosaic_0001>

<llo_original>
// kernel: tpu_custom_call.1
$region0: #{tpu_custom_call.1}
  #allocation0 [shape = 'u32[]', space=smem, size = 0x4, offset = 0x4, fixed_abs, tag = 'smem constant byte address 0x4 - core index']
  #allocation1 [shape = 'u32[144,128]{1,0:T(1,128)}', space=vmem, size = 0x12000, scoped, tag = 'internal scratch']
  %s0 = inlined_call_operand.vmem [shape: s8[256,384], index: 0, kind: input, shape index: {}]
  %s1 = inlined_call_operand.hbm [shape: bf16[384,128], index: 1, kind: input, shape index: {}]
  %s2 = inlined_call_operand.vmem [shape: f32[256,1], index: 2, kind: input, shape index: {}]
  %s3 = inlined_call_operand.hbm [shape: f32[256,128], index: 3, kind: output, shape index: {}]
  %s4 = sld [smem:[#allocation0]]
  $region26: #{tpu_custom_call.1} parent=0
    _
  %s6 = ssub.s32 1, %s4
  %s7 = scalar_select 0, %s6, %s4
  $region1: #{tpu_custom_call.1} parent=0
    #allocation2 [shape = 'u8[98304]{0}', space=vmem, size = 0x18000, scoped, tag = 'input window, operand 1, single buffered']
    #allocation3 [shape = 's32[1]{0}', space=sflag, size = 0x4, scoped, tag = 'scoped memory for tpu_custom_call.1']
    #allocation4 [shape = 's32[1]{0}', space=sflag, size = 0x4, scoped, tag = 'scoped memory for tpu_custom_call.1']
    #allocation5 [shape = 'u8[131072]{0}', space=vmem, size = 0x20000, scoped, tag = 'output window, operand 0, single buffered']
    %8 = vsyncpa [#allocation3], 0
    %9 = vsyncpa [#allocation4], 0
    // Predicated region
    $region2: #{tpu_custom_call.1} parent=1 // pred_check
      _
    $region3: #{tpu_custom_call.1} parent=1 // pred_check_branch
      %11 = sbr.rel (0) target = $region5
    $region4: #{tpu_custom_call.1} parent=1 // pred_region
      _
    $region5: #{tpu_custom_call.1} parent=1 // pred_fallthru
      _
    // Predicated region
    $region6: #{tpu_custom_call.1} parent=1 // pred_check
      _
    $region7: #{tpu_custom_call.1} parent=1 // pred_check_branch
      %13 = sbr.rel (0) target = $region9
    $region8: #{tpu_custom_call.1} parent=1 // pred_region
      %s15 = ssub.s32 3072, 3072
      %16 = vsyncadd [#allocation3], %s15
      %s17 = sshll.u32 [#allocation2], 4
      %s18 = int_to_ptr.vmem [resolvable:$true] %s17
      %23 = dma.hbm_to_vmem [thread:$0]  %s1, 3072, %s18, [#allocation3], 64, 64, 4
    $region9: #{tpu_custom_call.1} parent=1 // pred_fallthru
      _
    // Predicated region
    $region10: #{tpu_custom_call.1} parent=1 // pred_check
      _
    $region11: #{tpu_custom_call.1} parent=1 // pred_check_branch
      %25 = sbr.rel (0) target = $region13
    $region12: #{tpu_custom_call.1} parent=1 // pred_region
      _
    $region13: #{tpu_custom_call.1} parent=1 // pred_fallthru
      _
    // Predicated region
    $region14: #{tpu_custom_call.1} parent=1 // pred_check
      _
    $region15: #{tpu_custom_call.1} parent=1 // pred_check_branch
      %27 = sbr.rel (0) target = $region17
    $region16: #{tpu_custom_call.1} parent=1 // pred_region
      %28 = dma.done [#allocation3], 3072
    $region17: #{tpu_custom_call.1} parent=1 // pred_fallthru
      _
    %v30 = vld [vmem:[%s0] sm:$0xff]
    %v31 = vld [vmem:[%s0 + $0x8] sm:$0xff]
    %v32 = vld [vmem:[%s0 + $0x10] sm:$0xff]
    %v33 = vld [vmem:[%s0 + $0x18] sm:$0xff]
    %v34 = vld [vmem:[%s0 + $0x20] sm:$0xff]
    %v35 = vld [vmem:[%s0 + $0x28] sm:$0xff]
    %v36 = vld [vmem:[%s0 + $0x30] sm:$0xff]
    %v37 = vld [vmem:[%s0 + $0x38] sm:$0xff]
    %v38 = vld [vmem:[%s0 + $0x40] sm:$0xff]
    %v39 = vld [vmem:[%s0 + $0x48] sm:$0xff]
    %v40 = vld [vmem:[%s0 + $0x50] sm:$0xff]
    %v41 = vld [vmem:[%s0 + $0x58] sm:$0xff]
    %v42 = vld [vmem:[%s0 + $0x60] sm:$0xff]
    %v43 = vld [vmem:[%s0 + $0x68] sm:$0xff]
    %v44 = vld [vmem:[%s0 + $0x70] sm:$0xff]
    %v45 = vld [vmem:[%s0 + $0x78] sm:$0xff]
    %v46 = vld [vmem:[%s0 + $0x80] sm:$0xff]
    %v47 = vld [vmem:[%s0 + $0x88] sm:$0xff]
    %v48 = vld [vmem:[%s0 + $0x90] sm:$0xff]
    %v49 = vld [vmem:[%s0 + $0x98] sm:$0xff]
    %v50 = vld [vmem:[%s0 + $0xa0] sm:$0xff]
    %v51 = vld [vmem:[%s0 + $0xa8] sm:$0xff]
    %v52 = vld [vmem:[%s0 + $0xb0] sm:$0xff]
    %v53 = vld [vmem:[%s0 + $0xb8] sm:$0xff]
    %v54 = vunpack.c.l.s8.bf16 %v30
    %v55 = vunpack.c.l.s8.bf16 %v31
    %v56 = vunpack.c.l.s8.bf16 %v32
    %v57 = vunpack.c.h.s8.bf16 %v30
    %v58 = vunpack.c.h.s8.bf16 %v31
    %v59 = vunpack.c.h.s8.bf16 %v32
    %v60 = vunpack.c.l.s8.bf16 %v33
    %v61 = vunpack.c.l.s8.bf16 %v34
    %v62 = vunpack.c.l.s8.bf16 %v35
    %v63 = vunpack.c.h.s8.bf16 %v33
    %v64 = vunpack.c.h.s8.bf16 %v34
    %v65 = vunpack.c.h.s8.bf16 %v35
    %v66 = vunpack.c.l.s8.bf16 %v36
    %v67 = vunpack.c.l.s8.bf16 %v37
    %v68 = vunpack.c.l.s8.bf16 %v38
    %v69 = vunpack.c.h.s8.bf16 %v36
    %v70 = vunpack.c.h.s8.bf16 %v37
    %v71 = vunpack.c.h.s8.bf16 %v38
    %v72 = vunpack.c.l.s8.bf16 %v39
    %v73 = vunpack.c.l.s8.bf16 %v40
    %v74 = vunpack.c.l.s8.bf16 %v41
    %v75 = vunpack.c.h.s8.bf16 %v39
    %v76 = vunpack.c.h.s8.bf16 %v40
    %v77 = vunpack.c.h.s8.bf16 %v41
    %v78 = vunpack.c.l.s8.bf16 %v42
    %v79 = vunpack.c.l.s8.bf16 %v43
    %v80 = vunpack.c.l.s8.bf16 %v44
    %v81 = vunpack.c.h.s8.bf16 %v42
    %v82 = vunpack.c.h.s8.bf16 %v43
    %v83 = vunpack.c.h.s8.bf16 %v44
    %v84 = vunpack.c.l.s8.bf16 %v45
    %v85 = vunpack.c.l.s8.bf16 %v46
    %v86 = vunpack.c.l.s8.bf16 %v47
    %v87 = vunpack.c.h.s8.bf16 %v45
    %v88 = vunpack.c.h.s8.bf16 %v46
    %v89 = vunpack.c.h.s8.bf16 %v47
    %v90 = vunpack.c.l.s8.bf16 %v48
    %v91 = vunpack.c.l.s8.bf16 %v49
    %v92 = vunpack.c.l.s8.bf16 %v50
    %v93 = vunpack.c.h.s8.bf16 %v48
    %v94 = vunpack.c.h.s8.bf16 %v49
    %v95 = vunpack.c.h.s8.bf16 %v50
    %v96 = vunpack.c.l.s8.bf16 %v51
    %v97 = vunpack.c.l.s8.bf16 %v52
    %v98 = vunpack.c.l.s8.bf16 %v53
    %v99 = vunpack.c.h.s8.bf16 %v51
    %v100 = vunpack.c.h.s8.bf16 %v52
    %v101 = vunpack.c.h.s8.bf16 %v53
    %v102 = vld [vmem:[#allocation2] sm:$0xf]
    %v103 = vld [vmem:[#allocation2 + $0x4] sm:$0xf]
    %v104 = vld [vmem:[#allocation2 + $0x8] sm:$0xf]
    %v105 = vld [vmem:[#allocation2 + $0xc] sm:$0xf]
    %v106 = vld [vmem:[#allocation2 + $0x10] sm:$0xf]
    %v107 = vld [vmem:[#allocation2 + $0x14] sm:$0xf]
    %v108 = vld [vmem:[#allocation2 + $0x18] sm:$0xf]
    %v109 = vld [vmem:[#allocation2 + $0x1c] sm:$0xf]
    %v110 = vld [vmem:[#allocation2 + $0x20] sm:$0xf]
    %v111 = vld [vmem:[#allocation2 + $0x24] sm:$0xf]
    %v112 = vld [vmem:[#allocation2 + $0x28] sm:$0xf]
    %v113 = vld [vmem:[#allocation2 + $0x2c] sm:$0xf]
    %v114 = vld [vmem:[#allocation2 + $0x30] sm:$0xf]
    %v115 = vld [vmem:[#allocation2 + $0x34] sm:$0xf]
    %v116 = vld [vmem:[#allocation2 + $0x38] sm:$0xf]
    %v117 = vld [vmem:[#allocation2 + $0x3c] sm:$0xf]
    %v118 = vld [vmem:[#allocation2 + $0x40] sm:$0xf]
    %v119 = vld [vmem:[#allocation2 + $0x44] sm:$0xf]
    %v120 = vld [vmem:[#allocation2 + $0x48] sm:$0xf]
    %v121 = vld [vmem:[#allocation2 + $0x4c] sm:$0xf]
    %v122 = vld [vmem:[#allocation2 + $0x50] sm:$0xf]
    %v123 = vld [vmem:[#allocation2 + $0x54] sm:$0xf]
    %v124 = vld [vmem:[#allocation2 + $0x58] sm:$0xf]
    %v125 = vld [vmem:[#allocation2 + $0x5c] sm:$0xf]
    %v126 = vld [vmem:[#allocation2 + $0x60] sm:$0xf]
    %v127 = vld [vmem:[#allocation2 + $0x64] sm:$0xf]
    %v128 = vld [vmem:[#allocation2 + $0x68] sm:$0xf]
    %v129 = vld [vmem:[#allocation2 + $0x6c] sm:$0xf]
    %v130 = vld [vmem:[#allocation2 + $0x70] sm:$0xf]
    %v131 = vld [vmem:[#allocation2 + $0x74] sm:$0xf]
    %v132 = vld [vmem:[#allocation2 + $0x78] sm:$0xf]
    %v133 = vld [vmem:[#allocation2 + $0x7c] sm:$0xf]
    %v134 = vld [vmem:[#allocation2 + $0x80] sm:$0xf]
    %v135 = vld [vmem:[#allocation2 + $0x84] sm:$0xf]
    %v136 = vld [vmem:[#allocation2 + $0x88] sm:$0xf]
    %v137 = vld [vmem:[#allocation2 + $0x8c] sm:$0xf]
    %v138 = vld [vmem:[#allocation2 + $0x90] sm:$0xf]
    %v139 = vld [vmem:[#allocation2 + $0x94] sm:$0xf]
    %v140 = vld [vmem:[#allocation2 + $0x98] sm:$0xf]
    %v141 = vld [vmem:[#allocation2 + $0x9c] sm:$0xf]
    %v142 = vld [vmem:[#allocation2 + $0xa0] sm:$0xf]
    %v143 = vld [vmem:[#allocation2 + $0xa4] sm:$0xf]
    %v144 = vld [vmem:[#allocation2 + $0xa8] sm:$0xf]
    %v145 = vld [vmem:[#allocation2 + $0xac] sm:$0xf]
    %v146 = vld [vmem:[#allocation2 + $0xb0] sm:$0xf]
    %v147 = vld [vmem:[#allocation2 + $0xb4] sm:$0xf]
    %v148 = vld [vmem:[#allocation2 + $0xb8] sm:$0xf]
    %v149 = vld [vmem:[#allocation2 + $0xbc] sm:$0xf]
    %v198 = vunpack.c.l.b16 %v102
    %v199 = vunpack.c.l.b16 %v103
    %v200 = vunpack.c.l.b16 %v104
    %v201 = vunpack.c.l.b16 %v105
    %v202 = vunpack.c.l.b16 %v106
    %v203 = vunpack.c.l.b16 %v107
    %v204 = vunpack.c.l.b16 %v108
    %v205 = vunpack.c.l.b16 %v109
    %v206 = vunpack.c.l.b16 %v110
    %v207 = vunpack.c.l.b16 %v111
    %v208 = vunpack.c.l.b16 %v112
    %v209 = vunpack.c.l.b16 %v113
    %v210 = vunpack.c.l.b16 %v114
    %v211 = vunpack.c.l.b16 %v115
    %v212 = vunpack.c.l.b16 %v116
    %v213 = vunpack.c.l.b16 %v117
    %v214 = vunpack.c.l.b16 %v118
    %v215 = vunpack.c.l.b16 %v119
    %v216 = vunpack.c.l.b16 %v120
    %v217 = vunpack.c.l.b16 %v121
    %v218 = vunpack.c.l.b16 %v122
    %v219 = vunpack.c.l.b16 %v123
    %v220 = vunpack.c.l.b16 %v124
    %v221 = vunpack.c.l.b16 %v125
    %v222 = vunpack.c.l.b16 %v126
    %v223 = vunpack.c.l.b16 %v127
    %v224 = vunpack.c.l.b16 %v128
    %v225 = vunpack.c.l.b16 %v129
    %v226 = vunpack.c.l.b16 %v130
    %v227 = vunpack.c.l.b16 %v131
    %v228 = vunpack.c.l.b16 %v132
    %v229 = vunpack.c.l.b16 %v133
    %v230 = vunpack.c.l.b16 %v134
    %v231 = vunpack.c.l.b16 %v135
    %v232 = vunpack.c.l.b16 %v136
    %v233 = vunpack.c.l.b16 %v137
    %v234 = vunpack.c.l.b16 %v138
    %v235 = vunpack.c.l.b16 %v139
    %v236 = vunpack.c.l.b16 %v140
    %v237 = vunpack.c.l.b16 %v141
    %v238 = vunpack.c.l.b16 %v142
    %v239 = vunpack.c.l.b16 %v143
    %v240 = vunpack.c.l.b16 %v144
    %v241 = vunpack.c.l.b16 %v145
    %v242 = vunpack.c.l.b16 %v146
    %v243 = vunpack.c.l.b16 %v147
    %v244 = vunpack.c.l.b16 %v148
    %v245 = vunpack.c.l.b16 %v149
    %v246 = vpack.c.b16 %v199, %v198
    %v247 = vpack.c.b16 %v201, %v200
    %v248 = vpack.c.b16 %v203, %v202
    %v249 = vpack.c.b16 %v205, %v204
    %v250 = vpack.c.b16 %v207, %v206
    %v251 = vpack.c.b16 %v209, %v208
    %v252 = vpack.c.b16 %v211, %v210
    %v253 = vpack.c.b16 %v213, %v212
    %v254 = vpack.c.b16 %v215, %v214
    %v255 = vpack.c.b16 %v217, %v216
    %v256 = vpack.c.b16 %v219, %v218
    %v257 = vpack.c.b16 %v221, %v220
    %v258 = vpack.c.b16 %v223, %v222
    %v259 = vpack.c.b16 %v225, %v224
    %v260 = vpack.c.b16 %v227, %v226
    %v261 = vpack.c.b16 %v229, %v228
    %v262 = vpack.c.b16 %v231, %v230
    %v263 = vpack.c.b16 %v233, %v232
    %v264 = vpack.c.b16 %v235, %v234
    %v265 = vpack.c.b16 %v237, %v236
    %v266 = vpack.c.b16 %v239, %v238
    %v267 = vpack.c.b16 %v241, %v240
    %v268 = vpack.c.b16 %v243, %v242
    %v269 = vpack.c.b16 %v245, %v244
    %294 = vmatprep.subr.bf16.mxu0 0
    %295 = vmatpush1.bf16.msra.mxu0 %v246
    %296 = vmatprep.subr.bf16.mxu0 0
    %297 = vmatpush1.bf16.msra.mxu0 %v247
    %298 = vmatprep.subr.bf16.mxu0 0
    %299 = vmatpush1.bf16.msra.mxu0 %v248
    %300 = vmatprep.subr.bf16.mxu0 0
    %301 = vmatpush1.bf16.msra.mxu0 %v249
    %302 = vmatprep.subr.bf16.mxu0 0
    %303 = vmatpush1.bf16.msra.mxu0 %v250
    %304 = vmatprep.subr.bf16.mxu0 0
    %305 = vmatpush1.bf16.msra.mxu0 %v251
    %306 = vmatprep.subr.bf16.mxu0 0
    %307 = vmatpush1.bf16.msra.mxu0 %v252
    %308 = vmatprep.subr.bf16.mxu0 0
    %309 = vmatpush1.bf16.msra.mxu0 %v253
    %310 = vmatprep.subr.bf16.mxu0 0
    %311 = vmatpush1.bf16.msra.mxu0 %v254
    %312 = vmatprep.subr.bf16.mxu0 0
    %313 = vmatpush1.bf16.msra.mxu0 %v255
    %314 = vmatprep.subr.bf16.mxu0 0
    %315 = vmatpush1.bf16.msra.mxu0 %v256
    %316 = vmatprep.subr.bf16.mxu0 0
    %317 = vmatpush1.bf16.msra.mxu0 %v257
    %318 = vmatprep.subr.bf16.mxu0 0
    %319 = vmatpush1.bf16.msra.mxu0 %v258
    %320 = vmatprep.subr.bf16.mxu0 0
    %321 = vmatpush1.bf16.msra.mxu0 %v259
    %322 = vmatprep.subr.bf16.mxu0 0
    %323 = vmatpush1.bf16.msra.mxu0 %v260
    %324 = vmatprep.subr.bf16.mxu0 0
    %325 = vmatpush1.bf16.msra.mxu0 %v261
    %326 = vmatprep.mubr.bf16.mxu0 %v55
    %327 = vmatmul.mubr.bf16.gmra.mrb[0].mxu0 %v54
    %v328 = vpop.f32.mrb[0].mxu0
    %v329 = vadd.f32 0.0, %v328
    %v330 = vpop.f32.mrb[0].mxu0
    %v331 = vpop.f32.mrb[0].mxu0
    %v332 = vadd.f32 0.0, %v331
    %v333 = vpop.f32.mrb[0].mxu0
    %334 = vmatprep.mubr.bf16.mxu0 %v58
    %335 = vmatmul.mubr.bf16.gmra.mrb[0].mxu0 %v57
    %v336 = vpop.f32.mrb[0].mxu0
    %v337 = vadd.f32 0.0, %v336
    %v338 = vpop.f32.mrb[0].mxu0
    %v339 = vpop.f32.mrb[0].mxu0
    %v340 = vadd.f32 0.0, %v339
    %v341 = vpop.f32.mrb[0].mxu0
    %342 = vmatprep.mubr.bf16.mxu0 %v61
    %343 = vmatmul.mubr.bf16.gmra.mrb[0].mxu0 %v60
    %v344 = vpop.f32.mrb[0].mxu0
    %v345 = vadd.f32 0.0, %v344
    %v346 = vpop.f32.mrb[0].mxu0
    %v347 = vpop.f32.mrb[0].mxu0
    %v348 = vadd.f32 0.0, %v347
    %v349 = vpop.f32.mrb[0].mxu0
    %350 = vmatprep.mubr.bf16.mxu0 %v64
    %351 = vmatmul.mubr.bf16.gmra.mrb[0].mxu0 %v63
    %v352 = vpop.f32.mrb[0].mxu0
    %v353 = vadd.f32 0.0, %v352
    %v354 = vpop.f32.mrb[0].mxu0
    %v355 = vpop.f32.mrb[0].mxu0
    %v356 = vadd.f32 0.0, %v355
    %v357 = vpop.f32.mrb[0].mxu0
    %358 = vmatprep.mubr.bf16.mxu0 %v67
    %359 = vmatmul.mubr.bf16.gmra.mrb[0].mxu0 %v66
    %v360 = vpop.f32.mrb[0].mxu0
    %v361 = vadd.f32 0.0, %v360
    %v362 = vpop.f32.mrb[0].mxu0
    %v363 = vpop.f32.mrb[0].mxu0
    %v364 = vadd.f32 0.0, %v363
    %v365 = vpop.f32.mrb[0].mxu0
    %366 = vmatprep.mubr.bf16.mxu0 %v70
    %367 = vmatmul.mubr.bf16.gmra.mrb[0].mxu0 %v69
    %v368 = vpop.f32.mrb[0].mxu0
    %v369 = vadd.f32 0.0, %v368
    %v370 = vpop.f32.mrb[0].mxu0
    %v371 = vpop.f32.mrb[0].mxu0
    %v372 = vadd.f32 0.0, %v371
    %v373 = vpop.f32.mrb[0].mxu0
    %374 = vmatprep.mubr.bf16.mxu0 %v73
    %375 = vmatmul.mubr.bf16.gmra.mrb[0].mxu0 %v72
    %v376 = vpop.f32.mrb[0].mxu0
    %v377 = vadd.f32 0.0, %v376
    %v378 = vpop.f32.mrb[0].mxu0
    %v379 = vpop.f32.mrb[0].mxu0
    %v380 = vadd.f32 0.0, %v379
    %v381 = vpop.f32.mrb[0].mxu0
    %382 = vmatprep.mubr.bf16.mxu0 %v76
    %383 = vmatmul.mubr.bf16.gmra.mrb[0].mxu0 %v75
    %v384 = vpop.f32.mrb[0].mxu0
    %v385 = vadd.f32 0.0, %v384
    %v386 = vpop.f32.mrb[0].mxu0
    %v387 = vpop.f32.mrb[0].mxu0
    %v388 = vadd.f32 0.0, %v387
    %v389 = vpop.f32.mrb[0].mxu0
    %390 = vmatprep.mubr.bf16.mxu0 %v79
    %391 = vmatmul.mubr.bf16.gmra.mrb[0].mxu0 %v78
    %v392 = vpop.f32.mrb[0].mxu0
    %v393 = vadd.f32 0.0, %v392
    %v394 = vpop.f32.mrb[0].mxu0
    %v395 = vpop.f32.mrb[0].mxu0
    %v396 = vadd.f32 0.0, %v395
    %v397 = vpop.f32.mrb[0].mxu0
    %398 = vmatprep.mubr.bf16.mxu0 %v82
    %399 = vmatmul.mubr.bf16.gmra.mrb[0].mxu0 %v81
    %v400 = vpop.f32.mrb[0].mxu0
    %v401 = vadd.f32 0.0, %v400
    %v402 = vpop.f32.mrb[0].mxu0
    %v403 = vpop.f32.mrb[0].mxu0
    %v404 = vadd.f32 0.0, %v403
    %v405 = vpop.f32.mrb[0].mxu0
    %406 = vmatprep.mubr.bf16.mxu0 %v85
    %407 = vmatmul.mubr.bf16.gmra.mrb[0].mxu0 %v84
    %v408 = vpop.f32.mrb[0].mxu0
    %v409 = vadd.f32 0.0, %v408
    %v410 = vpop.f32.mrb[0].mxu0
    %v411 = vpop.f32.mrb[0].mxu0
    %v412 = vadd.f32 0.0, %v411
    %v413 = vpop.f32.mrb[0].mxu0
    %414 = vmatprep.mubr.bf16.mxu0 %v88
    %415 = vmatmul.mubr.bf16.gmra.mrb[0].mxu0 %v87
    %v416 = vpop.f32.mrb[0].mxu0
    %v417 = vadd.f32 0.0, %v416
    %v418 = vpop.f32.mrb[0].mxu0
    %v419 = vpop.f32.mrb[0].mxu0
    %v420 = vadd.f32 0.0, %v419
    %v421 = vpop.f32.mrb[0].mxu0
    %422 = vmatprep.mubr.bf16.mxu0 %v91
    %423 = vmatmul.mubr.bf16.gmra.mrb[0].mxu0 %v90
    %v424 = vpop.f32.mrb[0].mxu0
    %v425 = vadd.f32 0.0, %v424
    %v426 = vpop.f32.mrb[0].mxu0
    %v427 = vpop.f32.mrb[0].mxu0
    %v428 = vadd.f32 0.0, %v427
    %v429 = vpop.f32.mrb[0].mxu0
    %430 = vmatprep.mubr.bf16.mxu0 %v94
    %431 = vmatmul.mubr.bf16.gmra.mrb[0].mxu0 %v93
    %v432 = vpop.f32.mrb[0].mxu0
    %v433 = vadd.f32 0.0, %v432
    %v434 = vpop.f32.mrb[0].mxu0
    %v435 = vpop.f32.mrb[0].mxu0
    %v436 = vadd.f32 0.0, %v435
    %v437 = vpop.f32.mrb[0].mxu0
    %438 = vmatprep.mubr.bf16.mxu0 %v97
    %439 = vmatmul.mubr.bf16.gmra.mrb[0].mxu0 %v96
    %v440 = vpop.f32.mrb[0].mxu0
    %v441 = vadd.f32 0.0, %v440
    %v442 = vpop.f32.mrb[0].mxu0
    %v443 = vpop.f32.mrb[0].mxu0
    %v444 = vadd.f32 0.0, %v443
    %v445 = vpop.f32.mrb[0].mxu0
    %446 = vmatprep.mubr.bf16.mxu0 %v100
    %447 = vmatmul.mubr.bf16.gmra.mrb[0].mxu0 %v99
    %v448 = vpop.f32.mrb[0].mxu0
    %v449 = vadd.f32 0.0, %v448
    %v450 = vpop.f32.mrb[0].mxu0
    %v451 = vpop.f32.mrb[0].mxu0
    %v452 = vadd.f32 0.0, %v451
    %v453 = vpop.f32.mrb[0].mxu0
    %454 = vdwg.mxu0
    %455 = vmatprep.subr.bf16.mxu0 0
    %456 = vmatpush1.bf16.msra.mxu0 %v262
    %457 = vmatprep.subr.bf16.mxu0 0
    %458 = vmatpush1.bf16.msra.mxu0 %v263
    %459 = vmatprep.subr.bf16.mxu0 0
    %460 = vmatpush1.bf16.msra.mxu0 %v264
    %461 = vmatprep.subr.bf16.mxu0 0
    %462 = vmatpush1.bf16.msra.mxu0 %v265
    %463 = vmatprep.subr.bf16.mxu0 0
    %464 = vmatpush1.bf16.msra.mxu0 %v266
    %465 = vmatprep.subr.bf16.mxu0 0
    %466 = vmatpush1.bf16.msra.mxu0 %v267
    %467 = vmatprep.subr.bf16.mxu0 0
    %468 = vmatpush1.bf16.msra.mxu0 %v268
    %469 = vmatprep.subr.bf16.mxu0 0
    %470 = vmatpush1.bf16.msra.mxu0 %v269
    %471 = vmatprep.subr.bf16.mxu0 0
    %472 = vmatpush1.bf16.msra.mxu0 0
    %473 = vmatprep.subr.bf16.mxu0 0
    %474 = vmatpush1.bf16.msra.mxu0 0
    %475 = vmatprep.subr.bf16.mxu0 0
    %476 = vmatpush1.bf16.msra.mxu0 0
    %477 = vmatprep.subr.bf16.mxu0 0
    %478 = vmatpush1.bf16.msra.mxu0 0
    %479 = vmatprep.subr.bf16.mxu0 0
    %480 = vmatpush1.bf16.msra.mxu0 0
    %481 = vmatprep.subr.bf16.mxu0 0
    %482 = vmatpush1.bf16.msra.mxu0 0
    %483 = vmatprep.subr.bf16.mxu0 0
    %484 = vmatpush1.bf16.msra.mxu0 0
    %485 = vmatprep.subr.bf16.mxu0 0
    %486 = vmatpush1.bf16.msra.mxu0 0
    %487 = vmatprep.mubr.bf16.mxu0 0
    %488 = vmatmul.mubr.bf16.gmra.mrb[0].mxu0 %v56
    %v489 = vpop.f32.mrb[0].mxu0
    %v490 = vadd.f32 %v329, %v489
    %v491 = vpop.f32.mrb[0].mxu0
    %v492 = vpop.f32.mrb[0].mxu0
    %v493 = vadd.f32 %v332, %v492
    %v494 = vpop.f32.mrb[0].mxu0
    %495 = vmatprep.mubr.bf16.mxu0 0
    %496 = vmatmul.mubr.bf16.gmra.mrb[0].mxu0 %v59
    %v497 = vpop.f32.mrb[0].mxu0
    %v498 = vadd.f32 %v337, %v497
    %v499 = vpop.f32.mrb[0].mxu0
    %v500 = vpop.f32.mrb[0].mxu0
    %v501 = vadd.f32 %v340, %v500
    %v502 = vpop.f32.mrb[0].mxu0
    %503 = vmatprep.mubr.bf16.mxu0 0
    %504 = vmatmul.mubr.bf16.gmra.mrb[0].mxu0 %v62
    %v505 = vpop.f32.mrb[0].mxu0
    %v506 = vadd.f32 %v345, %v505
    %v507 = vpop.f32.mrb[0].mxu0
    %v508 = vpop.f32.mrb[0].mxu0
    %v509 = vadd.f32 %v348, %v508
    %v510 = vpop.f32.mrb[0].mxu0
    %511 = vmatprep.mubr.bf16.mxu0 0
    %512 = vmatmul.mubr.bf16.gmra.mrb[0].mxu0 %v65
    %v513 = vpop.f32.mrb[0].mxu0
    %v514 = vadd.f32 %v353, %v513
    %v515 = vpop.f32.mrb[0].mxu0
    %v516 = vpop.f32.mrb[0].mxu0
    %v517 = vadd.f32 %v356, %v516
    %v518 = vpop.f32.mrb[0].mxu0
    %519 = vmatprep.mubr.bf16.mxu0 0
    %520 = vmatmul.mubr.bf16.gmra.mrb[0].mxu0 %v68
    %v521 = vpop.f32.mrb[0].mxu0
    %v522 = vadd.f32 %v361, %v521
    %v523 = vpop.f32.mrb[0].mxu0
    %v524 = vpop.f32.mrb[0].mxu0
    %v525 = vadd.f32 %v364, %v524
    %v526 = vpop.f32.mrb[0].mxu0
    %527 = vmatprep.mubr.bf16.mxu0 0
    %528 = vmatmul.mubr.bf16.gmra.mrb[0].mxu0 %v71
    %v529 = vpop.f32.mrb[0].mxu0
    %v530 = vadd.f32 %v369, %v529
    %v531 = vpop.f32.mrb[0].mxu0
    %v532 = vpop.f32.mrb[0].mxu0
    %v533 = vadd.f32 %v372, %v532
    %v534 = vpop.f32.mrb[0].mxu0
    %535 = vmatprep.mubr.bf16.mxu0 0
    %536 = vmatmul.mubr.bf16.gmra.mrb[0].mxu0 %v74
    %v537 = vpop.f32.mrb[0].mxu0
    %v538 = vadd.f32 %v377, %v537
    %v539 = vpop.f32.mrb[0].mxu0
    %v540 = vpop.f32.mrb[0].mxu0
    %v541 = vadd.f32 %v380, %v540
    %v542 = vpop.f32.mrb[0].mxu0
    %543 = vmatprep.mubr.bf16.mxu0 0
    %544 = vmatmul.mubr.bf16.gmra.mrb[0].mxu0 %v77
    %v545 = vpop.f32.mrb[0].mxu0
    %v546 = vadd.f32 %v385, %v545
    %v547 = vpop.f32.mrb[0].mxu0
    %v548 = vpop.f32.mrb[0].mxu0
    %v549 = vadd.f32 %v388, %v548
    %v550 = vpop.f32.mrb[0].mxu0
    %551 = vmatprep.mubr.bf16.mxu0 0
    %552 = vmatmul.mubr.bf16.gmra.mrb[0].mxu0 %v80
    %v553 = vpop.f32.mrb[0].mxu0
    %v554 = vadd.f32 %v393, %v553
    %v555 = vpop.f32.mrb[0].mxu0
    %v556 = vpop.f32.mrb[0].mxu0
    %v557 = vadd.f32 %v396, %v556
    %v558 = vpop.f32.mrb[0].mxu0
    %559 = vmatprep.mubr.bf16.mxu0 0
    %560 = vmatmul.mubr.bf16.gmra.mrb[0].mxu0 %v83
    %v561 = vpop.f32.mrb[0].mxu0
    %v562 = vadd.f32 %v401, %v561
    %v563 = vpop.f32.mrb[0].mxu0
    %v564 = vpop.f32.mrb[0].mxu0
    %v565 = vadd.f32 %v404, %v564
    %v566 = vpop.f32.mrb[0].mxu0
    %567 = vmatprep.mubr.bf16.mxu0 0
    %568 = vmatmul.mubr.bf16.gmra.mrb[0].mxu0 %v86
    %v569 = vpop.f32.mrb[0].mxu0
    %v570 = vadd.f32 %v409, %v569
    %v571 = vpop.f32.mrb[0].mxu0
    %v572 = vpop.f32.mrb[0].mxu0
    %v573 = vadd.f32 %v412, %v572
    %v574 = vpop.f32.mrb[0].mxu0
    %575 = vmatprep.mubr.bf16.mxu0 0
    %576 = vmatmul.mubr.bf16.gmra.mrb[0].mxu0 %v89
    %v577 = vpop.f32.mrb[0].mxu0
    %v578 = vadd.f32 %v417, %v577
    %v579 = vpop.f32.mrb[0].mxu0
    %v580 = vpop.f32.mrb[0].mxu0
    %v581 = vadd.f32 %v420, %v580
    %v582 = vpop.f32.mrb[0].mxu0
    %583 = vmatprep.mubr.bf16.mxu0 0
    %584 = vmatmul.mubr.bf16.gmra.mrb[0].mxu0 %v92
    %v585 = vpop.f32.mrb[0].mxu0
    %v586 = vadd.f32 %v425, %v585
    %v587 = vpop.f32.mrb[0].mxu0
    %v588 = vpop.f32.mrb[0].mxu0
    %v589 = vadd.f32 %v428, %v588
    %v590 = vpop.f32.mrb[0].mxu0
    %591 = vmatprep.mubr.bf16.mxu0 0
    %592 = vmatmul.mubr.bf16.gmra.mrb[0].mxu0 %v95
    %v593 = vpop.f32.mrb[0].mxu0
    %v594 = vadd.f32 %v433, %v593
    %v595 = vpop.f32.mrb[0].mxu0
    %v596 = vpop.f32.mrb[0].mxu0
    %v597 = vadd.f32 %v436, %v596
    %v598 = vpop.f32.mrb[0].mxu0
    %599 = vmatprep.mubr.bf16.mxu0 0
    %600 = vmatmul.mubr.bf16.gmra.mrb[0].mxu0 %v98
    %v601 = vpop.f32.mrb[0].mxu0
    %v602 = vadd.f32 %v441, %v601
    %v603 = vpop.f32.mrb[0].mxu0
    %v604 = vpop.f32.mrb[0].mxu0
    %v605 = vadd.f32 %v444, %v604
    %v606 = vpop.f32.mrb[0].mxu0
    %607 = vmatprep.mubr.bf16.mxu0 0
    %608 = vmatmul.mubr.bf16.gmra.mrb[0].mxu0 %v101
    %v609 = vpop.f32.mrb[0].mxu0
    %v610 = vadd.f32 %v449, %v609
    %v611 = vpop.f32.mrb[0].mxu0
    %v612 = vpop.f32.mrb[0].mxu0
    %v613 = vadd.f32 %v452, %v612
    %v614 = vpop.f32.mrb[0].mxu0
    %615 = vdwg.mxu0
    %v616 = vld [vmem:[%s2] sm:$0xff]
    %v617 = vld [vmem:[%s2 + $0x8] sm:$0xff]
    %v618 = vld [vmem:[%s2 + $0x10] sm:$0xff]
    %v619 = vld [vmem:[%s2 + $0x18] sm:$0xff]
    %v620 = vld [vmem:[%s2 + $0x20] sm:$0xff]
    %v621 = vld [vmem:[%s2 + $0x28] sm:$0xff]
    %v622 = vld [vmem:[%s2 + $0x30] sm:$0xff]
    %v623 = vld [vmem:[%s2 + $0x38] sm:$0xff]
    %v624 = vld [vmem:[%s2 + $0x40] sm:$0xff]
    %v625 = vld [vmem:[%s2 + $0x48] sm:$0xff]
    %v626 = vld [vmem:[%s2 + $0x50] sm:$0xff]
    %v627 = vld [vmem:[%s2 + $0x58] sm:$0xff]
    %v628 = vld [vmem:[%s2 + $0x60] sm:$0xff]
    %v629 = vld [vmem:[%s2 + $0x68] sm:$0xff]
    %v630 = vld [vmem:[%s2 + $0x70] sm:$0xff]
    %v631 = vld [vmem:[%s2 + $0x78] sm:$0xff]
    %v632 = vld [vmem:[%s2 + $0x80] sm:$0xff]
    %v633 = vld [vmem:[%s2 + $0x88] sm:$0xff]
    %v634 = vld [vmem:[%s2 + $0x90] sm:$0xff]
    %v635 = vld [vmem:[%s2 + $0x98] sm:$0xff]
    %v636 = vld [vmem:[%s2 + $0xa0] sm:$0xff]
    %v637 = vld [vmem:[%s2 + $0xa8] sm:$0xff]
    %v638 = vld [vmem:[%s2 + $0xb0] sm:$0xff]
    %v639 = vld [vmem:[%s2 + $0xb8] sm:$0xff]
    %v640 = vld [vmem:[%s2 + $0xc0] sm:$0xff]
    %v641 = vld [vmem:[%s2 + $0xc8] sm:$0xff]
    %v642 = vld [vmem:[%s2 + $0xd0] sm:$0xff]
    %v643 = vld [vmem:[%s2 + $0xd8] sm:$0xff]
    %v644 = vld [vmem:[%s2 + $0xe0] sm:$0xff]
    %v645 = vld [vmem:[%s2 + $0xe8] sm:$0xff]
    %v646 = vld [vmem:[%s2 + $0xf0] sm:$0xff]
    %v647 = vld [vmem:[%s2 + $0xf8] sm:$0xff]
    %649 = vset.pattern.permute.xlu0 0
    %650 = vperm.xlu0 %649, %v616
    %v651 = vpop.permute.xlu0 %650
    %654 = vset.pattern.permute.xlu0 0
    %655 = vperm.xlu0 %654, %v617
    %v656 = vpop.permute.xlu0 %655
    %659 = vset.pattern.permute.xlu0 0
    %660 = vperm.xlu0 %659, %v618
    %v661 = vpop.permute.xlu0 %660
    %664 = vset.pattern.permute.xlu0 0
    %665 = vperm.xlu0 %664, %v619
    %v666 = vpop.permute.xlu0 %665
    %669 = vset.pattern.permute.xlu0 0
    %670 = vperm.xlu0 %669, %v620
    %v671 = vpop.permute.xlu0 %670
    %674 = vset.pattern.permute.xlu0 0
    %675 = vperm.xlu0 %674, %v621
    %v676 = vpop.permute.xlu0 %675
    %679 = vset.pattern.permute.xlu0 0
    %680 = vperm.xlu0 %679, %v622
    %v681 = vpop.permute.xlu0 %680
    %684 = vset.pattern.permute.xlu0 0
    %685 = vperm.xlu0 %684, %v623
    %v686 = vpop.permute.xlu0 %685
    %689 = vset.pattern.permute.xlu0 0
    %690 = vperm.xlu0 %689, %v624
    %v691 = vpop.permute.xlu0 %690
    %694 = vset.pattern.permute.xlu0 0
    %695 = vperm.xlu0 %694, %v625
    %v696 = vpop.permute.xlu0 %695
    %699 = vset.pattern.permute.xlu0 0
    %700 = vperm.xlu0 %699, %v626
    %v701 = vpop.permute.xlu0 %700
    %704 = vset.pattern.permute.xlu0 0
    %705 = vperm.xlu0 %704, %v627
    %v706 = vpop.permute.xlu0 %705
    %709 = vset.pattern.permute.xlu0 0
    %710 = vperm.xlu0 %709, %v628
    %v711 = vpop.permute.xlu0 %710
    %714 = vset.pattern.permute.xlu0 0
    %715 = vperm.xlu0 %714, %v629
    %v716 = vpop.permute.xlu0 %715
    %719 = vset.pattern.permute.xlu0 0
    %720 = vperm.xlu0 %719, %v630
    %v721 = vpop.permute.xlu0 %720
    %724 = vset.pattern.permute.xlu0 0
    %725 = vperm.xlu0 %724, %v631
    %v726 = vpop.permute.xlu0 %725
    %729 = vset.pattern.permute.xlu0 0
    %730 = vperm.xlu0 %729, %v632
    %v731 = vpop.permute.xlu0 %730
    %734 = vset.pattern.permute.xlu0 0
    %735 = vperm.xlu0 %734, %v633
    %v736 = vpop.permute.xlu0 %735
    %739 = vset.pattern.permute.xlu0 0
    %740 = vperm.xlu0 %739, %v634
    %v741 = vpop.permute.xlu0 %740
    %744 = vset.pattern.permute.xlu0 0
    %745 = vperm.xlu0 %744, %v635
    %v746 = vpop.permute.xlu0 %745
    %749 = vset.pattern.permute.xlu0 0
    %750 = vperm.xlu0 %749, %v636
    %v751 = vpop.permute.xlu0 %750
    %754 = vset.pattern.permute.xlu0 0
    %755 = vperm.xlu0 %754, %v637
    %v756 = vpop.permute.xlu0 %755
    %759 = vset.pattern.permute.xlu0 0
    %760 = vperm.xlu0 %759, %v638
    %v761 = vpop.permute.xlu0 %760
    %764 = vset.pattern.permute.xlu0 0
    %765 = vperm.xlu0 %764, %v639
    %v766 = vpop.permute.xlu0 %765
    %769 = vset.pattern.permute.xlu0 0
    %770 = vperm.xlu0 %769, %v640
    %v771 = vpop.permute.xlu0 %770
    %774 = vset.pattern.permute.xlu0 0
    %775 = vperm.xlu0 %774, %v641
    %v776 = vpop.permute.xlu0 %775
    %779 = vset.pattern.permute.xlu0 0
    %780 = vperm.xlu0 %779, %v642
    %v781 = vpop.permute.xlu0 %780
    %784 = vset.pattern.permute.xlu0 0
    %785 = vperm.xlu0 %784, %v643
    %v786 = vpop.permute.xlu0 %785
    %789 = vset.pattern.permute.xlu0 0
    %790 = vperm.xlu0 %789, %v644
    %v791 = vpop.permute.xlu0 %790
    %794 = vset.pattern.permute.xlu0 0
    %795 = vperm.xlu0 %794, %v645
    %v796 = vpop.permute.xlu0 %795
    %799 = vset.pattern.permute.xlu0 0
    %800 = vperm.xlu0 %799, %v646
    %v801 = vpop.permute.xlu0 %800
    %804 = vset.pattern.permute.xlu0 0
    %805 = vperm.xlu0 %804, %v647
    %v806 = vpop.permute.xlu0 %805
    %v808 = vmul.f32 %v490, %v651
    %v809 = vmul.f32 %v493, %v656
    %v810 = vmul.f32 %v498, %v661
    %v811 = vmul.f32 %v501, %v666
    %v812 = vmul.f32 %v506, %v671
    %v813 = vmul.f32 %v509, %v676
    %v814 = vmul.f32 %v514, %v681
    %v815 = vmul.f32 %v517, %v686
    %v816 = vmul.f32 %v522, %v691
    %v817 = vmul.f32 %v525, %v696
    %v818 = vmul.f32 %v530, %v701
    %v819 = vmul.f32 %v533, %v706
    %v820 = vmul.f32 %v538, %v711
    %v821 = vmul.f32 %v541, %v716
    %v822 = vmul.f32 %v546, %v721
    %v823 = vmul.f32 %v549, %v726
    %v824 = vmul.f32 %v554, %v731
    %v825 = vmul.f32 %v557, %v736
    %v826 = vmul.f32 %v562, %v741
    %v827 = vmul.f32 %v565, %v746
    %v828 = vmul.f32 %v570, %v751
    %v829 = vmul.f32 %v573, %v756
    %v830 = vmul.f32 %v578, %v761
    %v831 = vmul.f32 %v581, %v766
    %v832 = vmul.f32 %v586, %v771
    %v833 = vmul.f32 %v589, %v776
    %v834 = vmul.f32 %v594, %v781
    %v835 = vmul.f32 %v597, %v786
    %v836 = vmul.f32 %v602, %v791
    %v837 = vmul.f32 %v605, %v796
    %v838 = vmul.f32 %v610, %v801
    %v839 = vmul.f32 %v613, %v806
    %840 = vst [vmem:[#allocation5] sm:$0xff] %v808
    %841 = vst [vmem:[#allocation5 + $0x8] sm:$0xff] %v809
    %842 = vst [vmem:[#allocation5 + $0x10] sm:$0xff] %v810
    %843 = vst [vmem:[#allocation5 + $0x18] sm:$0xff] %v811
    %844 = vst [vmem:[#allocation5 + $0x20] sm:$0xff] %v812
    %845 = vst [vmem:[#allocation5 + $0x28] sm:$0xff] %v813
    %846 = vst [vmem:[#allocation5 + $0x30] sm:$0xff] %v814
    %847 = vst [vmem:[#allocation5 + $0x38] sm:$0xff] %v815
    %848 = vst [vmem:[#allocation5 + $0x40] sm:$0xff] %v816
    %849 = vst [vmem:[#allocation5 + $0x48] sm:$0xff] %v817
    %850 = vst [vmem:[#allocation5 + $0x50] sm:$0xff] %v818
    %851 = vst [vmem:[#allocation5 + $0x58] sm:$0xff] %v819
    %852 = vst [vmem:[#allocation5 + $0x60] sm:$0xff] %v820
    %853 = vst [vmem:[#allocation5 + $0x68] sm:$0xff] %v821
    %854 = vst [vmem:[#allocation5 + $0x70] sm:$0xff] %v822
    %855 = vst [vmem:[#allocation5 + $0x78] sm:$0xff] %v823
    %856 = vst [vmem:[#allocation5 + $0x80] sm:$0xff] %v824
    %857 = vst [vmem:[#allocation5 + $0x88] sm:$0xff] %v825
    %858 = vst [vmem:[#allocation5 + $0x90] sm:$0xff] %v826
    %859 = vst [vmem:[#allocation5 + $0x98] sm:$0xff] %v827
    %860 = vst [vmem:[#allocation5 + $0xa0] sm:$0xff] %v828
    %861 = vst [vmem:[#allocation5 + $0xa8] sm:$0xff] %v829
    %862 = vst [vmem:[#allocation5 + $0xb0] sm:$0xff] %v830
    %863 = vst [vmem:[#allocation5 + $0xb8] sm:$0xff] %v831
    %864 = vst [vmem:[#allocation5 + $0xc0] sm:$0xff] %v832
    %865 = vst [vmem:[#allocation5 + $0xc8] sm:$0xff] %v833
    %866 = vst [vmem:[#allocation5 + $0xd0] sm:$0xff] %v834
    %867 = vst [vmem:[#allocation5 + $0xd8] sm:$0xff] %v835
    %868 = vst [vmem:[#allocation5 + $0xe0] sm:$0xff] %v836
    %869 = vst [vmem:[#allocation5 + $0xe8] sm:$0xff] %v837
    %870 = vst [vmem:[#allocation5 + $0xf0] sm:$0xff] %v838
    %871 = vst [vmem:[#allocation5 + $0xf8] sm:$0xff] %v839
    // Predicated region
    $region18: #{tpu_custom_call.1} parent=1 // pred_check
      _
    $region19: #{tpu_custom_call.1} parent=1 // pred_check_branch
      %873 = sbr.rel (0) target = $region21
    $region20: #{tpu_custom_call.1} parent=1 // pred_region
      %s875 = ssub.s32 4096, 4096
      %876 = vsyncadd [#allocation4], %s875
      %s877 = sshll.u32 [#allocation5], 4
      %s878 = int_to_ptr.vmem [resolvable:$true] %s877
      %883 = dma.vmem_to_hbm [thread:$0]  %s878, 4096, %s3, [#allocation4], 128, 128, 8
    $region21: #{tpu_custom_call.1} parent=1 // pred_fallthru
      _
    // Predicated region
    $region22: #{tpu_custom_call.1} parent=1 // pred_check
      _
    $region23: #{tpu_custom_call.1} parent=1 // pred_check_branch
      %885 = sbr.rel (0) target = $region25
    $region24: #{tpu_custom_call.1} parent=1 // pred_region
      %886 = dma.done [#allocation4], 4096
    $region25: #{tpu_custom_call.1} parent=1 // pred_fallthru
      _
    %887 = vsyncpa [#allocation3], 1
    %888 = vsyncpa [#allocation4], 1

</llo_original>
